<compile_context>
chip_gen: v6e
topology: v6e:2x2x1
jax: 0.10.0
libtpu: 0.0.40
codegen_flags: <defaults>
</compile_context>

<pallas_src>
import jax
import jax.numpy as jnp
from jax.experimental import pallas as pl
from jax.experimental.pallas import tpu as pltpu


def _copy_kernel(in_ref, out_ref):
    # Tile-wise pass-through (identity forward).
    out_ref[...] = in_ref[...]


def _round_down_to(x, m):
    return (x // m) * m


def _sublane_multiple(dtype):
    # Rows per packed vreg: 8 for 4-byte, 16 for bf16/f16, 32 for int8/fp8.
    return max(8, 32 // jnp.dtype(dtype).itemsize)


def _pick_lane_width(total):
    # Widest lane-dense last dim (multiple of 128) that evenly divides total.
    for cand in (8192, 4096, 2048, 1024, 512, 256, 128):
        if total % cand == 0:
            return cand
    return None


def _grid_semantics():
    # CORE_PARALLEL guarantees the per-TensorCore split on v7x (2 TCs/chip);
    # plain "parallel" elsewhere (codegen-neutral on single-TC v5e/v6e).
    try:
        kind = jax.devices()[0].device_kind.lower()
    except Exception:  # pragma: no cover - defensive
        kind = ""
    if "v7" in kind:
        return (pltpu.CORE_PARALLEL,)
    return ("parallel",)


def _pallas_identity_copy(emb):
    """Materialize a distinct output buffer holding `emb` via a Pallas copy."""
    orig_shape = emb.shape
    total = emb.size
    itemsize = jnp.dtype(emb.dtype).itemsize
    total_bytes = total * itemsize

    # Lane-dense flat view.  Fallback (width == original last dim) always
    # reshapes cleanly and uses a legal full-extent last-dim block.
    width = _pick_lane_width(total)
    if width is None:
        width = orig_shape[-1]
    rows = total // width
    flat = emb.reshape(rows, width)

    sub = _sublane_multiple(emb.dtype)

    # ~4 MiB per operand block: in+out double-buffered = ~16 MiB VMEM.
    max_tile_bytes = 4 << 20
    tile_cap = max(sub, _round_down_to(max_tile_bytes // (width * itemsize), sub))

    # Guarantee a multi-step (>= ~4) grid for anything beyond a couple of MiB
    # so DMA-in / DMA-out overlap and both v7x TensorCores get work.
    if total_bytes > (2 << 20):
        step_cap = max(sub, _round_down_to(max(rows // 4, sub), sub))
        tile_cap = min(tile_cap, step_cap)

    if rows <= tile_cap:
        tile_m = rows            # single full-extent block (always legal)
    else:
        tile_m = tile_cap        # multiple of sublane packing; last block masked
    grid = (pl.cdiv(rows, tile_m),)

    out = pl.pallas_call(
        _copy_kernel,
        out_shape=jax.ShapeDtypeStruct((rows, width), emb.dtype),
        grid=grid,
        in_specs=[pl.BlockSpec((tile_m, width), lambda i: (i, 0))],
        out_specs=pl.BlockSpec((tile_m, width), lambda i: (i, 0)),
        compiler_params=pltpu.CompilerParams(
            dimension_semantics=_grid_semantics(),
            vmem_limit_bytes=32 * 1024 * 1024,
        ),
        cost_estimate=pl.CostEstimate(
            flops=0, transcendentals=0, bytes_accessed=2 * total_bytes),
    )(flat)
    return out.reshape(orig_shape)


def to_acoustic_embedding(emb, *, cond_dim=128, use_attn_pool=False,
                          materialize_copy=False):
    """Pallas implementation of ToAcousticEmbedding.forward.

    emb: (B, T, D) with D == cond_dim.

    Default (use_attn_pool=False) forward is an identity: returns `emb`
    directly with no kernel launch / no HBM traffic.  Set
    `materialize_copy=True` only if a distinct output buffer is contractually
    required; that path runs a tiled Pallas HBM copy.
    """
    assert emb.shape[-1] == cond_dim, "last dim must equal cond_dim"
    if use_attn_pool:
        # TODO(synk): PerceiverResampler path not available (external module).
        raise NotImplementedError("use_attn_pool=True requires PerceiverResampler")

    if not materialize_copy:
        # Pure identity: the fastest kernel is no kernel.
        return emb
    return _pallas_identity_copy(emb)


if __name__ == "__main__":
    key = jax.random.PRNGKey(0)
    B, T, cond_dim = 2, 8, 128
    emb = jax.random.normal(key, (B, T, cond_dim), dtype=jnp.float32)

    # Hot path: identity, no kernel launch.
    out_fast = jax.block_until_ready(to_acoustic_embedding(emb, cond_dim=cond_dim))
    assert out_fast.shape == emb.shape and out_fast.dtype == emb.dtype
    assert bool(jnp.allclose(out_fast, emb)), "identity fast path mismatch"

    # Kernel path: materialized copy through the Pallas pipeline (f32).
    out_copy = jax.block_until_ready(
        to_acoustic_embedding(emb, cond_dim=cond_dim, materialize_copy=True))
    assert out_copy.shape == emb.shape and out_copy.dtype == emb.dtype
    assert bool(jnp.allclose(out_copy, emb)), "pallas copy mismatch (f32)"

    # bf16: exercises the 16-row sublane-packing tile rounding.
    emb_bf16 = jax.random.normal(key, (2, 8, 128), dtype=jnp.bfloat16)
    out_bf16 = jax.block_until_ready(
        to_acoustic_embedding(emb_bf16, cond_dim=128, materialize_copy=True))
    assert out_bf16.dtype == emb_bf16.dtype
    assert bool(jnp.all(out_bf16 == emb_bf16)), "pallas copy mismatch (bf16)"

    # Non-128-divisible total size: exercises the safe width fallback.
    emb_odd = jax.random.normal(key, (2, 8, 100), dtype=jnp.float32)
    out_odd = jax.block_until_ready(
        to_acoustic_embedding(emb_odd, cond_dim=100, materialize_copy=True))
    assert bool(jnp.allclose(out_odd, emb_odd)), "pallas copy mismatch (fallback)"

    # Medium tensor (4 MiB): exercises the multi-step pipelined grid.
    emb_med = jax.random.normal(key, (8, 1024, 128), dtype=jnp.float32)
    out_med = jax.block_until_ready(
        to_acoustic_embedding(emb_med, cond_dim=128, materialize_copy=True))
    assert bool(jnp.allclose(out_med, emb_med)), "pallas copy mismatch (medium)"

    print("KERNEL_OK")
</pallas_src>

<mosaic_0001>
module attributes {stable_mosaic.version = 11 : i64} {
  func.func @_copy_kernel(%arg0: i32, %arg1: memref<1x2048xf32, #tpu.memory_space<vmem>>, %arg2: memref<1x2048xf32, #tpu.memory_space<vmem>>) attributes {dimension_semantics = [#tpu.dimension_semantics<parallel>], iteration_bounds = array<i64: 1>, scalar_prefetch = 0 : i64, scratch_operands = 0 : i64, tpu.core_type = #tpu.core_type<tc>, window_params = [{transform_indices = @transform_0, window_bounds = array<i64: 1, 2048>}, {transform_indices = @transform_1, window_bounds = array<i64: 1, 2048>}]} {
    %c0 = arith.constant 0 : index
    %c0_0 = arith.constant 0 : index
    %0 = vector.load %arg1[%c0, %c0_0] : memref<1x2048xf32, #tpu.memory_space<vmem>>, vector<1x2048xf32>
    %c0_1 = arith.constant 0 : index
    %c0_2 = arith.constant 0 : index
    %1 = vector.load %arg2[%c0_1, %c0_2] : memref<1x2048xf32, #tpu.memory_space<vmem>>, vector<1x2048xf32>
    tpu.vector_store %arg2[%c0_1, %c0_2], %0 {strides = array<i32>} : memref<1x2048xf32, #tpu.memory_space<vmem>>, vector<1x2048xf32>,
    return
  }
  func.func @transform_0(%arg0: i32) -> (i32, i32) {
    %c0_i32 = arith.constant 0 : i32
    %c0_i32_0 = arith.constant 0 : i32
    return %arg0, %c0_i32 : i32, i32
  }
  func.func @transform_1(%arg0: i32) -> (i32, i32) {
    %c0_i32 = arith.constant 0 : i32
    %c0_i32_0 = arith.constant 0 : i32
    return %arg0, %c0_i32 : i32, i32
  }
}

</mosaic_0001>

<llo_original>
// kernel: tpu_custom_call.1
$region0: #{tpu_custom_call.1}
  #allocation0 [shape = 'u32[]', space=smem, size = 0x4, offset = 0x4, fixed_abs, tag = 'smem constant byte address 0x4 - core index']
  #allocation1 [shape = 'u32[144,128]{1,0:T(1,128)}', space=vmem, size = 0x12000, scoped, tag = 'internal scratch']
  %s0 = inlined_call_operand.hbm [shape: f32[1,2048], index: 0, kind: input, shape index: {}]
  %s1 = inlined_call_operand.hbm [shape: f32[1,2048], index: 1, kind: output, shape index: {}]
  %s2 = sld [smem:[#allocation0]]
  $region18: #{tpu_custom_call.1} parent=0
    _
  %s4 = ssub.s32 1, %s2
  %s5 = scalar_select 0, %s4, %s2
  $region1: #{tpu_custom_call.1} parent=0
    #allocation2 [shape = 'u8[8192]{0}', space=vmem, size = 0x2000, scoped, tag = 'input window, operand 0, single buffered']
    #allocation3 [shape = 's32[1]{0}', space=sflag, size = 0x4, scoped, tag = 'scoped memory for tpu_custom_call.1']
    #allocation4 [shape = 's32[1]{0}', space=sflag, size = 0x4, scoped, tag = 'scoped memory for tpu_custom_call.1']
    #allocation5 [shape = 'u8[8192]{0}', space=vmem, size = 0x2000, scoped, tag = 'output window, operand 0, single buffered']
    %6 = vsyncpa [#allocation3], 0
    %7 = vsyncpa [#allocation4], 0
    // Predicated region
    $region2: #{tpu_custom_call.1} parent=1 // pred_check
      _
    $region3: #{tpu_custom_call.1} parent=1 // pred_check_branch
      %9 = sbr.rel (0) target = $region5
    $region4: #{tpu_custom_call.1} parent=1 // pred_region
      %s11 = ssub.s32 256, 256
      %12 = vsyncadd [#allocation3], %s11
      %s14 = sshll.u32 [#allocation2], 4
      %s15 = int_to_ptr.vmem [resolvable:$true] %s14
      %17 = dma.hbm_to_vmem [thread:$0]  %s0, 256, %s15, [#allocation3]
    $region5: #{tpu_custom_call.1} parent=1 // pred_fallthru
      _
    // Predicated region
    $region6: #{tpu_custom_call.1} parent=1 // pred_check
      _
    $region7: #{tpu_custom_call.1} parent=1 // pred_check_branch
      %19 = sbr.rel (0) target = $region9
    $region8: #{tpu_custom_call.1} parent=1 // pred_region
      %20 = dma.done [#allocation3], 256
    $region9: #{tpu_custom_call.1} parent=1 // pred_fallthru
      _
    %v21 = vld [vmem:[#allocation2] sm:$0xff]
    %v22 = vld [vmem:[#allocation2 + $0x8] sm:$0xff]
    %23 = vst [vmem:[#allocation5] sm:$0xff] %v21
    %24 = vst [vmem:[#allocation5 + $0x8] sm:$0xff] %v22
    // Predicated region
    $region10: #{tpu_custom_call.1} parent=1 // pred_check
      _
    $region11: #{tpu_custom_call.1} parent=1 // pred_check_branch
      %26 = sbr.rel (0) target = $region13
    $region12: #{tpu_custom_call.1} parent=1 // pred_region
      %s28 = ssub.s32 256, 256
      %29 = vsyncadd [#allocation4], %s28
      %s31 = sshll.u32 [#allocation5], 4
      %s32 = int_to_ptr.vmem [resolvable:$true] %s31
      %34 = dma.vmem_to_hbm [thread:$0]  %s32, 256, %s1, [#allocation4]
    $region13: #{tpu_custom_call.1} parent=1 // pred_fallthru
      _
    // Predicated region
    $region14: #{tpu_custom_call.1} parent=1 // pred_check
      _
    $region15: #{tpu_custom_call.1} parent=1 // pred_check_branch
      %36 = sbr.rel (0) target = $region17
    $region16: #{tpu_custom_call.1} parent=1 // pred_region
      %37 = dma.done [#allocation4], 256
    $region17: #{tpu_custom_call.1} parent=1 // pred_fallthru
      _
    %38 = vsyncpa [#allocation3], 1
    %39 = vsyncpa [#allocation4], 1

</llo_original>
